<compile_context>
chip_gen: v7x
topology: tpu7x:2x2x1
jax: 0.10.0
libtpu: 0.0.40
codegen_flags: <defaults>
</compile_context>

<pallas_src>
import jax
import jax.numpy as jnp
from jax import lax
from jax.experimental import pallas as pl
from jax.experimental.pallas import tpu as pltpu


def _gated_cnn_kernel(cur_ref, left_ref, right_ref, w_ref, o_ref):
    # cur_ref:   (1, TS, H)  current sequence tile (f32)
    # left_ref:  (1, 8, H)   the 8 rows just before this tile (clamped at j=0)
    # right_ref: (1, 8, H)   the 8 rows just after this tile (clamped at last)
    # w_ref:     (K, H, 2H)  fused [conv | gate] weights, bf16, W[k, in, out]
    # o_ref:     (1, TS, H)  gated output tile
    j = pl.program_id(1)
    n_j = pl.num_programs(1)
    ts, h = cur_ref.shape[1], cur_ref.shape[2]
    n_taps = w_ref.shape[0]
    pad = (n_taps - 1) // 2

    cur = cur_ref[0]                  # (TS, H) f32
    left = left_ref[0]                # (8, H)  rows [j*TS-8, j*TS)
    right = right_ref[0]              # (8, H)  rows [(j+1)*TS, (j+1)*TS+8)
    row = lax.broadcasted_iota(jnp.int32, (ts, 1), 0)

    acc = jnp.zeros((ts, w_ref.shape[2]), jnp.float32)
    for d in range(-pad, pad + 1):    # K is small & static -> fully unrolled
        if d == 0:
            xk = cur
        else:
            # Want xk[t] = x_global[j*TS + t + d].  Realign the tile with an
            # XLU roll (no sublane-misaligned slice); rows that would wrap are
            # patched from the neighbour halo block, or zeroed at the true
            # sequence boundary (the conv's zero padding).
            xk = pltpu.roll(cur, shift=(-d) % ts, axis=0)
            if d < 0:
                halo = pltpu.roll(left, shift=(-d) % 8, axis=0)
                if ts > 8:
                    halo = jnp.concatenate(
                        [halo, jnp.zeros((ts - 8, h), halo.dtype)], axis=0)
                use_halo = row < (-d)
                in_bounds = j > 0
            else:
                halo = pltpu.roll(right, shift=(-d) % 8, axis=0)
                if ts > 8:
                    halo = jnp.concatenate(
                        [jnp.zeros((ts - 8, h), halo.dtype), halo], axis=0)
                use_halo = row >= (ts - d)
                in_bounds = j < n_j - 1
            patch = jnp.where(in_bounds, halo, jnp.zeros_like(halo))
            xk = jnp.where(use_halo, patch, xk)
        # One fused MXU op per tap: bf16 operands, f32 accumulation.
        acc = acc + jnp.dot(xk.astype(jnp.bfloat16), w_ref[d + pad],
                            preferred_element_type=jnp.float32)

    a = acc[:, :h]                    # conv branch
    g = acc[:, h:]                    # gate branch  (f32 sigmoid / gating)
    o_ref[0] = (a * jax.nn.sigmoid(g)).astype(o_ref.dtype)


def gated_cnn(x, w_cnn, w_gate, kernel_size, *, seq_tile=64):
    """x: (B, S, H) f32; w_cnn/w_gate: PyTorch Conv1d layout (H_out, H_in, K)."""
    B, S, H = x.shape
    K = kernel_size
    assert K % 2 == 1, "same-length conv requires odd kernel_size (as in spec)"
    pad = (K - 1) // 2
    assert pad <= 8, "halo blocks are 8 rows; kernel_size <= 17 supported"
    assert seq_tile % 8 == 0 and seq_tile >= 8

    ts = seq_tile
    s_pad = ((S + ts - 1) // ts) * ts          # round S up to the tile quantum
    x_in = x if s_pad == S else jnp.pad(x, ((0, 0), (0, s_pad - S), (0, 0)))
    n_j = s_pad // ts
    nb8 = s_pad // 8                           # number of 8-row blocks along S

    # Fuse [conv | gate] weights into one (K, H_in, 2*H_out) bf16 tensor.
    wa = jnp.transpose(w_cnn, (2, 1, 0))       # (K, H_in, H_out)
    wb = jnp.transpose(w_gate, (2, 1, 0))
    w_ab = jnp.concatenate([wa, wb], axis=-1).astype(jnp.bfloat16)

    cur_spec = pl.BlockSpec((1, ts, H), lambda b, j: (b, j, 0))
    left_spec = pl.BlockSpec(
        (1, 8, H), lambda b, j: (b, jnp.maximum(j * (ts // 8) - 1, 0), 0))
    right_spec = pl.BlockSpec(
        (1, 8, H), lambda b, j: (b, jnp.minimum((j + 1) * (ts // 8), nb8 - 1), 0))
    w_spec = pl.BlockSpec((K, H, 2 * H), lambda b, j: (0, 0, 0))
    out_spec = pl.BlockSpec((1, ts, H), lambda b, j: (b, j, 0))

    cost = pl.CostEstimate(
        flops=4 * K * B * s_pad * H * H,       # both convs, 2 flops per MAC
        transcendentals=B * s_pad * H,         # sigmoid
        bytes_accessed=2 * 4 * B * s_pad * H + 2 * K * H * 2 * H)

    out = pl.pallas_call(
        _gated_cnn_kernel,
        out_shape=jax.ShapeDtypeStruct((B, s_pad, H), x.dtype),
        grid_spec=pltpu.PrefetchScalarGridSpec(
            num_scalar_prefetch=0,
            grid=(B, n_j),
            in_specs=[cur_spec, left_spec, right_spec, w_spec],
            out_specs=out_spec),
        compiler_params=pltpu.CompilerParams(
            dimension_semantics=("parallel", "parallel"),
            vmem_limit_bytes=64 * 1024 * 1024),
        cost_estimate=cost,
    )(x_in, x_in, x_in, w_ab)
    return out if s_pad == S else out[:, :S, :]


def gated_cnn_ref(x, w_cnn, w_gate, kernel_size):
    """Pure-JAX reference matching PyTorch Conv1d semantics (f32)."""
    pad = (kernel_size - 1) // 2
    x_pad = jnp.pad(x, ((0, 0), (pad, pad), (0, 0)))
    S = x.shape[1]

    def conv(w):
        # w: (out, in, K);  y[b, t, o] = sum_{i,k} w[o,i,k] * x_pad[b, t+k, i]
        acc = jnp.zeros((x.shape[0], S, w.shape[0]), jnp.float32)
        for k in range(kernel_size):
            acc = acc + jnp.einsum('bti,oi->bto', x_pad[:, k:k + S, :],
                                   w[:, :, k])
        return acc

    a = conv(w_cnn)
    b = jax.nn.sigmoid(conv(w_gate))
    return a * b


if __name__ == "__main__":
    # batch=2, seq=256, hidden_size=128, kernel_size=3  (aligned small shapes:
    # H multiple of 128 for lane-dense tiles, S a multiple of the 64-row tile
    # so the grid has interior tiles exercising both halos).
    B, S, H, K = 2, 256, 128, 3

    key = jax.random.PRNGKey(0)
    kx, k1, k2 = jax.random.split(key, 3)
    x = jax.random.normal(kx, (B, S, H), dtype=jnp.float32)
    # Conv1d weights: (out_channels, in_channels, kernel_size), bias=False
    w_cnn = jax.random.normal(k1, (H, H, K), dtype=jnp.float32) * 0.1
    w_gate = jax.random.normal(k2, (H, H, K), dtype=jnp.float32) * 0.1

    out = gated_cnn(x, w_cnn, w_gate, K, seq_tile=64)
    out = jax.block_until_ready(out)

    ref = gated_cnn_ref(x, w_cnn, w_gate, K)
    assert out.shape == (B, S, H)
    max_err = jnp.max(jnp.abs(out - ref))
    assert jnp.allclose(out, ref, atol=5e-2, rtol=5e-2), f"max abs err {max_err}"

    print("KERNEL_OK")
</pallas_src>

<mosaic_0001>
module attributes {stable_mosaic.version = 11 : i64} {
  func.func @_gated_cnn_kernel(%arg0: i32, %arg1: i32, %arg2: memref<1x64x128xf32, #tpu.memory_space<vmem>>, %arg3: memref<1x8x128xf32, #tpu.memory_space<vmem>>, %arg4: memref<1x8x128xf32, #tpu.memory_space<vmem>>, %arg5: memref<3x128x256xbf16, #tpu.memory_space<vmem>>, %arg6: memref<1x64x128xf32, #tpu.memory_space<vmem>>) attributes {dimension_semantics = [#tpu.dimension_semantics<parallel>, #tpu.dimension_semantics<parallel>], iteration_bounds = array<i64: 2, 4>, scalar_prefetch = 0 : i64, scratch_operands = 0 : i64, tpu.core_type = #tpu.core_type<tc>, window_params = [{transform_indices = @transform_0, window_bounds = array<i64: 1, 64, 128>}, {transform_indices = @transform_1, window_bounds = array<i64: 1, 8, 128>}, {transform_indices = @transform_2, window_bounds = array<i64: 1, 8, 128>}, {pipeline_mode = #tpu.pipeline_mode<synchronous>, transform_indices = @transform_3, window_bounds = array<i64: 3, 128, 256>}, {transform_indices = @transform_4, window_bounds = array<i64: 1, 64, 128>}]} {
    %c0 = arith.constant 0 : index
    %c0_0 = arith.constant 0 : index
    %c0_1 = arith.constant 0 : index
    %0 = vector.load %arg2[%c0, %c0_0, %c0_1] : memref<1x64x128xf32, #tpu.memory_space<vmem>>, vector<1x64x128xf32>
    %1 = vector.shape_cast %0 : vector<1x64x128xf32> to vector<64x128xf32>
    %c0_2 = arith.constant 0 : index
    %c0_3 = arith.constant 0 : index
    %c0_4 = arith.constant 0 : index
    %2 = vector.load %arg3[%c0_2, %c0_3, %c0_4] : memref<1x8x128xf32, #tpu.memory_space<vmem>>, vector<1x8x128xf32>
    %3 = vector.shape_cast %2 : vector<1x8x128xf32> to vector<8x128xf32>
    %c0_5 = arith.constant 0 : index
    %c0_6 = arith.constant 0 : index
    %c0_7 = arith.constant 0 : index
    %4 = vector.load %arg4[%c0_5, %c0_6, %c0_7] : memref<1x8x128xf32, #tpu.memory_space<vmem>>, vector<1x8x128xf32>
    %5 = vector.shape_cast %4 : vector<1x8x128xf32> to vector<8x128xf32>
    %6 = tpu.iota {dimensions = array<i32: 0>} : vector<64x1xi32>
    %cst = arith.constant 0.000000e+00 : f32
    %7 = vector.broadcast %cst : f32 to vector<64x256xf32>
    %c1_i32 = arith.constant 1 : i32
    %8 = tpu.dynamic_rotate %1 by %c1_i32 dim 0 : vector<64x128xf32>, i32 -> vector<64x128xf32>
    %c1_i32_8 = arith.constant 1 : i32
    %9 = tpu.dynamic_rotate %3 by %c1_i32_8 dim 0 : vector<8x128xf32>, i32 -> vector<8x128xf32>
    %cst_9 = arith.constant 0.000000e+00 : f32
    %10 = vector.broadcast %cst_9 : f32 to vector<56x128xf32>
    %11 = tpu.concatenate %9, %10 in 0 : vector<8x128xf32>, vector<56x128xf32> -> vector<64x128xf32>
    %c1_i32_10 = arith.constant 1 : i32
    %12 = vector.broadcast %c1_i32_10 : i32 to vector<64x1xi32>
    %13 = arith.cmpi slt, %6, %12 : vector<64x1xi32>
    %c0_i32 = arith.constant 0 : i32
    %14 = arith.cmpi sgt, %arg1, %c0_i32 : i32
    %cst_11 = arith.constant 0.000000e+00 : f32
    %15 = vector.broadcast %cst_11 : f32 to vector<64x128xf32>
    %16 = arith.select %14, %11, %15 : vector<64x128xf32>
    %17 = vector.shape_cast %13 : vector<64x1xi1> to vector<64x1xi1>
    %18 = vector.broadcast %17 : vector<64x1xi1> to vector<64x128xi1>
    %19 = arith.select %18, %16, %8 : vector<64x128xi1>, vector<64x128xf32>
    %20 = arith.truncf %19 : vector<64x128xf32> to vector<64x128xbf16>
    %c0_12 = arith.constant 0 : index
    %c0_13 = arith.constant 0 : index
    %c0_14 = arith.constant 0 : index
    %21 = vector.load %arg5[%c0_12, %c0_13, %c0_14] : memref<3x128x256xbf16, #tpu.memory_space<vmem>>, vector<1x128x256xbf16>
    %22 = vector.shape_cast %21 : vector<1x128x256xbf16> to vector<128x256xbf16>
    %cst_15 = arith.constant dense<0.000000e+00> : vector<64x256xf32>
    %23 = tpu.matmul %20, %22, %cst_15 {dimension_numbers = #tpu.dot_dimension_numbers<[1], [0], [0], [1], [0, 0, 1, 1], [], []>} : vector<64x128xbf16>, vector<128x256xbf16>, vector<64x256xf32> -> vector<64x256xf32>
    %24 = arith.addf %7, %23 : vector<64x256xf32>
    %25 = arith.truncf %1 : vector<64x128xf32> to vector<64x128xbf16>
    %c1 = arith.constant 1 : index
    %c0_16 = arith.constant 0 : index
    %c0_17 = arith.constant 0 : index
    %26 = vector.load %arg5[%c1, %c0_16, %c0_17] : memref<3x128x256xbf16, #tpu.memory_space<vmem>>, vector<1x128x256xbf16>
    %27 = vector.shape_cast %26 : vector<1x128x256xbf16> to vector<128x256xbf16>
    %cst_18 = arith.constant dense<0.000000e+00> : vector<64x256xf32>
    %28 = tpu.matmul %25, %27, %cst_18 {dimension_numbers = #tpu.dot_dimension_numbers<[1], [0], [0], [1], [0, 0, 1, 1], [], []>} : vector<64x128xbf16>, vector<128x256xbf16>, vector<64x256xf32> -> vector<64x256xf32>
    %29 = arith.addf %24, %28 : vector<64x256xf32>
    %c63_i32 = arith.constant 63 : i32
    %30 = tpu.dynamic_rotate %1 by %c63_i32 dim 0 : vector<64x128xf32>, i32 -> vector<64x128xf32>
    %c7_i32 = arith.constant 7 : i32
    %31 = tpu.dynamic_rotate %5 by %c7_i32 dim 0 : vector<8x128xf32>, i32 -> vector<8x128xf32>
    %cst_19 = arith.constant 0.000000e+00 : f32
    %32 = vector.broadcast %cst_19 : f32 to vector<56x128xf32>
    %33 = tpu.concatenate %32, %31 in 0 : vector<56x128xf32>, vector<8x128xf32> -> vector<64x128xf32>
    %c63_i32_20 = arith.constant 63 : i32
    %34 = vector.broadcast %c63_i32_20 : i32 to vector<64x1xi32>
    %35 = arith.cmpi sge, %6, %34 : vector<64x1xi32>
    %c3_i32 = arith.constant 3 : i32
    %36 = arith.cmpi slt, %arg1, %c3_i32 : i32
    %cst_21 = arith.constant 0.000000e+00 : f32
    %37 = vector.broadcast %cst_21 : f32 to vector<64x128xf32>
    %38 = arith.select %36, %33, %37 : vector<64x128xf32>
    %39 = vector.shape_cast %35 : vector<64x1xi1> to vector<64x1xi1>
    %40 = vector.broadcast %39 : vector<64x1xi1> to vector<64x128xi1>
    %41 = arith.select %40, %38, %30 : vector<64x128xi1>, vector<64x128xf32>
    %42 = arith.truncf %41 : vector<64x128xf32> to vector<64x128xbf16>
    %c2 = arith.constant 2 : index
    %c0_22 = arith.constant 0 : index
    %c0_23 = arith.constant 0 : index
    %43 = vector.load %arg5[%c2, %c0_22, %c0_23] : memref<3x128x256xbf16, #tpu.memory_space<vmem>>, vector<1x128x256xbf16>
    %44 = vector.shape_cast %43 : vector<1x128x256xbf16> to vector<128x256xbf16>
    %cst_24 = arith.constant dense<0.000000e+00> : vector<64x256xf32>
    %45 = tpu.matmul %42, %44, %cst_24 {dimension_numbers = #tpu.dot_dimension_numbers<[1], [0], [0], [1], [0, 0, 1, 1], [], []>} : vector<64x128xbf16>, vector<128x256xbf16>, vector<64x256xf32> -> vector<64x256xf32>
    %46 = arith.addf %29, %45 : vector<64x256xf32>
    %47 = vector.extract_strided_slice %46 {offsets = [0, 0], sizes = [64, 128], strides = [1, 1]} : vector<64x256xf32> to vector<64x128xf32>
    %48 = vector.extract_strided_slice %46 {offsets = [0, 128], sizes = [64, 128], strides = [1, 1]} : vector<64x256xf32> to vector<64x128xf32>
    %49 = arith.negf %48 : vector<64x128xf32>
    %50 = math.exp %49 : vector<64x128xf32>
    %cst_25 = arith.constant 1.000000e+00 : f32
    %51 = vector.broadcast %cst_25 : f32 to vector<64x128xf32>
    %52 = arith.addf %51, %50 : vector<64x128xf32>
    %53 = arith.divf %51, %52 : vector<64x128xf32>
    %54 = arith.mulf %47, %53 : vector<64x128xf32>
    %c0_26 = arith.constant 0 : index
    %c0_27 = arith.constant 0 : index
    %c0_28 = arith.constant 0 : index
    %55 = vector.load %arg6[%c0_26, %c0_27, %c0_28] : memref<1x64x128xf32, #tpu.memory_space<vmem>>, vector<1x64x128xf32>
    %56 = vector.shape_cast %55 : vector<1x64x128xf32> to vector<64x128xf32>
    %57 = vector.shape_cast %54 : vector<64x128xf32> to vector<1x64x128xf32>
    tpu.vector_store %arg6[%c0_26, %c0_27, %c0_28], %57 {strides = array<i32>} : memref<1x64x128xf32, #tpu.memory_space<vmem>>, vector<1x64x128xf32>,
    return
  }
  func.func @transform_0(%arg0: i32, %arg1: i32) -> (i32, i32, i32) {
    %c0_i32 = arith.constant 0 : i32
    %c0_i32_0 = arith.constant 0 : i32
    return %arg0, %arg1, %c0_i32 : i32, i32, i32
  }
  func.func @transform_1(%arg0: i32, %arg1: i32) -> (i32, i32, i32) {
    %c8_i32 = arith.constant 8 : i32
    %0 = arith.muli %arg1, %c8_i32 : i32
    %c1_i32 = arith.constant 1 : i32
    %1 = arith.subi %0, %c1_i32 : i32
    %c0_i32 = arith.constant 0 : i32
    %2 = arith.maxsi %1, %c0_i32 : i32
    %c0_i32_0 = arith.constant 0 : i32
    %c0_i32_1 = arith.constant 0 : i32
    return %arg0, %2, %c0_i32_0 : i32, i32, i32
  }
  func.func @transform_2(%arg0: i32, %arg1: i32) -> (i32, i32, i32) {
    %c1_i32 = arith.constant 1 : i32
    %0 = arith.addi %arg1, %c1_i32 : i32
    %c8_i32 = arith.constant 8 : i32
    %1 = arith.muli %0, %c8_i32 : i32
    %c31_i32 = arith.constant 31 : i32
    %2 = arith.minsi %1, %c31_i32 : i32
    %c0_i32 = arith.constant 0 : i32
    %c0_i32_0 = arith.constant 0 : i32
    return %arg0, %2, %c0_i32 : i32, i32, i32
  }
  func.func @transform_3(%arg0: i32, %arg1: i32) -> (i32, i32, i32) {
    %c0_i32 = arith.constant 0 : i32
    %c0_i32_0 = arith.constant 0 : i32
    %c0_i32_1 = arith.constant 0 : i32
    %c0_i32_2 = arith.constant 0 : i32
    return %c0_i32, %c0_i32_0, %c0_i32_1 : i32, i32, i32
  }
  func.func @transform_4(%arg0: i32, %arg1: i32) -> (i32, i32, i32) {
    %c0_i32 = arith.constant 0 : i32
    %c0_i32_0 = arith.constant 0 : i32
    return %arg0, %arg1, %c0_i32 : i32, i32, i32
  }
}

</mosaic_0001>

<llo_original>
// kernel: tpu_custom_call.1
$region0: #{tpu_custom_call.1}
  #allocation0 [shape = 'u32[]', space=smem, size = 0x4, offset = 0x4, fixed_abs, tag = 'smem constant byte address 0x4 - core index']
  #allocation1 [shape = 'u32[144,128]{1,0:T(1,128)}', space=vmem, size = 0x12000, scoped, tag = 'internal scratch']
  %s0 = inlined_call_operand.hbm [shape: f32[2,256,128], index: 0, kind: input, shape index: {}]
  %s1 = inlined_call_operand.hbm [shape: f32[2,256,128], index: 1, kind: input, shape index: {}]
  %s2 = inlined_call_operand.hbm [shape: f32[2,256,128], index: 2, kind: input, shape index: {}]
  %s3 = inlined_call_operand.hbm [shape: bf16[3,128,256], index: 3, kind: input, shape index: {}]
  %s4 = inlined_call_operand.hbm [shape: f32[2,256,128], index: 4, kind: output, shape index: {}]
  %s5 = sld [smem:[#allocation0]]
  $region65: #{tpu_custom_call.1} parent=0
    _
  %s7 = ssub.s32 1, %s5
  %s8 = scalar_select 0, %s7, %s5
  $region1: #{tpu_custom_call.1} parent=0
    #allocation2 [shape = 'u8[65536]{0}', space=vmem, size = 0x10000, scoped, tag = 'input window, operand 0']
    #allocation3 [shape = 's32[2]{0}', space=sflag, size = 0x8, scoped, tag = 'scoped memory for tpu_custom_call.1']
    #allocation4 [shape = 's32[2]{0}', space=sflag, size = 0x8, scoped, tag = 'scoped memory for tpu_custom_call.1']
    #allocation5 [shape = 'u8[8192]{0}', space=vmem, size = 0x2000, scoped, tag = 'input window, operand 1']
    #allocation6 [shape = 's32[2]{0}', space=sflag, size = 0x8, scoped, tag = 'scoped memory for tpu_custom_call.1']
    #allocation7 [shape = 'u8[8192]{0}', space=vmem, size = 0x2000, scoped, tag = 'input window, operand 2']
    #allocation8 [shape = 'u8[196608]{0}', space=vmem, size = 0x30000, scoped, tag = 'input window, operand 3, single buffered']
    #allocation9 [shape = 's32[1]{0}', space=sflag, size = 0x4, scoped, tag = 'scoped memory for tpu_custom_call.1']
    #allocation10 [shape = 'u8[65536]{0}', space=vmem, size = 0x10000, scoped, tag = 'output window, operand 0']
    %9 = vsyncpa [#allocation3], 0
    %s10 = scalar_lea.sflag [#allocation3], 1
    %11 = vsyncpa %s10, 0
    %12 = vsyncpa [#allocation6], 0
    %s13 = scalar_lea.sflag [#allocation6], 1
    %14 = vsyncpa %s13, 0
    %15 = vsyncpa [#allocation9], 0
    %16 = vsyncpa [#allocation4], 0
    %s17 = scalar_lea.sflag [#allocation4], 1
    %18 = vsyncpa %s17, 0
    loop: start=0, step=1, limit=10
    $region2: #{tpu_custom_call.1} parent=1 // loop_pre_header
      _
    $region3: #{tpu_custom_call.1} parent=1 // loop_header
      %s20 = sphi 0, %s24
      %p21 = scmp.ge.s32.totalorder %s20, 10
      %s27 = sphi 0, %s39
      %s28 = sphi 0, %s35
      %s29 = sphi 0, %s27
      %s30 = sphi 0, %s28
      %s31 = sphi 0, %s29
      %s32 = sphi 0, %s30
      %s44 = sphi 0, %s46
      %s47 = sphi 0, %s44
      %s48 = sphi 0, %s47
      %s64 = sphi 0, %s48
      %s80 = sphi 0, %s82
      %s83 = sphi 0, %s80
      %s84 = sphi 0, %s83
      %s100 = sphi 0, %s84
      %s116 = sphi 0, %s118
      %s119 = sphi 0, %s116
      %s120 = sphi 0, %s119
      %s136 = sphi 0, %s120
      %s140 = sphi 0, %s140
      %s142 = sphi 0, %s140
      %s143 = sphi 0, %s142
      %s157 = sphi 0, %s143
      %s165 = sphi 0, %s167
      %s168 = sphi 0, %s165
      %s169 = sphi 0, %s168
      %s185 = sphi 0, %s169
    $region4: #{tpu_custom_call.1} parent=1 // loop_header_branch
      %23 = sbr.rel (%p21) target = $region8
    $region5: #{tpu_custom_call.1} parent=1 // loop_body
      %s25 = ssub.s32 %s20, 1
      %s26 = ssub.s32 %s20, 2
      %s33 = sadd.s32 1, %s28
      %p34 = scmp.ge.s32.totalorder %s33, 4
      %s35 = scalar_select %p34, 0, %s33
      %s36 = sadd.s32 1, %s27
      %s37 = scalar_select %p34, %s36, %s27
      %p38 = scmp.ge.s32.totalorder %s37, 2
      %s39 = scalar_select %p38, 0, %s37
      %s40 = ssub.s32 %s27, %s39
      %s41 = ssub.s32 %s28, %s35
      %s42 = sor.u32 %s40, %s41
      %p43 = scmp.eq.s32.totalorder %s42, 0
      %s45 = sadd.s32 %s44, 1
      %s46 = scalar_select %p43, %s44, %s45
      %p49 = pneg %p43
      %p50 = scmp.eq.s32.totalorder %s20, 7
      %p51 = por %p49, %p50
      %p52 = scmp.ne.s32.totalorder %s44, %s47
      %p53 = scmp.eq.s32.totalorder %s20, 0
      %p54 = por %p52, %p53
      %p55 = scmp.ne.s32.totalorder %s44, %s47
      %p56 = scmp.eq.s32.totalorder %s25, 7
      %p57 = por %p55, %p56
      %p58 = scmp.ne.s32.totalorder %s47, %s48
      %p59 = scmp.eq.s32.totalorder %s25, 0
      %p60 = por %p58, %p59
      %p61 = scmp.ne.s32.totalorder %s47, %s48
      %p62 = scmp.eq.s32.totalorder %s26, 7
      %p63 = por %p61, %p62
      %p65 = scmp.ne.s32.totalorder %s48, %s64
      %p66 = scmp.eq.s32.totalorder %s26, 0
      %p67 = por %p65, %p66
      %s68 = smul.u32 %s28, 8
      %s69 = ssub.s32 %s68, 1
      %p70 = scmp.gt.s32.totalorder %s69, 0
      %s71 = scalar_select %p70, %s69, 0
      %s72 = smul.u32 %s35, 8
      %s73 = ssub.s32 %s72, 1
      %p74 = scmp.gt.s32.totalorder %s73, 0
      %s75 = scalar_select %p74, %s73, 0
      %s76 = ssub.s32 %s27, %s39
      %s77 = ssub.s32 %s71, %s75
      %s78 = sor.u32 %s76, %s77
      %p79 = scmp.eq.s32.totalorder %s78, 0
      %s81 = sadd.s32 %s80, 1
      %s82 = scalar_select %p79, %s80, %s81
      %p85 = pneg %p79
      %p86 = scmp.eq.s32.totalorder %s20, 7
      %p87 = por %p85, %p86
      %p88 = scmp.ne.s32.totalorder %s80, %s83
      %p89 = scmp.eq.s32.totalorder %s20, 0
      %p90 = por %p88, %p89
      %p91 = scmp.ne.s32.totalorder %s80, %s83
      %p92 = scmp.eq.s32.totalorder %s25, 7
      %p93 = por %p91, %p92
      %p94 = scmp.ne.s32.totalorder %s83, %s84
      %p95 = scmp.eq.s32.totalorder %s25, 0
      %p96 = por %p94, %p95
      %p97 = scmp.ne.s32.totalorder %s83, %s84
      %p98 = scmp.eq.s32.totalorder %s26, 7
      %p99 = por %p97, %p98
      %p101 = scmp.ne.s32.totalorder %s84, %s100
      %p102 = scmp.eq.s32.totalorder %s26, 0
      %p103 = por %p101, %p102
      %s104 = sadd.s32 %s28, 1
      %s105 = smul.u32 %s104, 8
      %p106 = scmp.lt.s32.totalorder %s105, 31
      %s107 = scalar_select %p106, %s105, 31
      %s108 = sadd.s32 %s35, 1
      %s109 = smul.u32 %s108, 8
      %p110 = scmp.lt.s32.totalorder %s109, 31
      %s111 = scalar_select %p110, %s109, 31
      %s112 = ssub.s32 %s27, %s39
      %s113 = ssub.s32 %s107, %s111
      %s114 = sor.u32 %s112, %s113
      %p115 = scmp.eq.s32.totalorder %s114, 0
      %s117 = sadd.s32 %s116, 1
      %s118 = scalar_select %p115, %s116, %s117
      %p121 = pneg %p115
      %p122 = scmp.eq.s32.totalorder %s20, 7
      %p123 = por %p121, %p122
      %p124 = scmp.ne.s32.totalorder %s116, %s119
      %p125 = scmp.eq.s32.totalorder %s20, 0
      %p126 = por %p124, %p125
      %p127 = scmp.ne.s32.totalorder %s116, %s119
      %p128 = scmp.eq.s32.totalorder %s25, 7
      %p129 = por %p127, %p128
      %p130 = scmp.ne.s32.totalorder %s119, %s120
      %p131 = scmp.eq.s32.totalorder %s25, 0
      %p132 = por %p130, %p131
      %p133 = scmp.ne.s32.totalorder %s119, %s120
      %p134 = scmp.eq.s32.totalorder %s26, 7
      %p135 = por %p133, %p134
      %p137 = scmp.ne.s32.totalorder %s120, %s136
      %p138 = scmp.eq.s32.totalorder %s26, 0
      %p139 = por %p137, %p138
      %s141 = sadd.s32 %s140, 1
      %p144 = scmp.eq.s32.totalorder %s20, 7
      %p145 = scmp.ne.s32.totalorder %s140, %s142
      %p146 = scmp.eq.s32.totalorder %s20, 0
      %p147 = por %p145, %p146
      %p148 = scmp.ne.s32.totalorder %s140, %s142
      %p149 = scmp.eq.s32.totalorder %s25, 7
      %p150 = por %p148, %p149
      %p151 = scmp.ne.s32.totalorder %s142, %s143
      %p152 = scmp.eq.s32.totalorder %s25, 0
      %p153 = por %p151, %p152
      %p154 = scmp.ne.s32.totalorder %s142, %s143
      %p155 = scmp.eq.s32.totalorder %s26, 7
      %p156 = por %p154, %p155
      %p158 = scmp.ne.s32.totalorder %s143, %s157
      %p159 = scmp.eq.s32.totalorder %s26, 0
      %p160 = por %p158, %p159
      %s161 = ssub.s32 %s27, %s39
      %s162 = ssub.s32 %s28, %s35
      %s163 = sor.u32 %s161, %s162
      %p164 = scmp.eq.s32.totalorder %s163, 0
      %s166 = sadd.s32 %s165, 1
      %s167 = scalar_select %p164, %s165, %s166
      %p170 = pneg %p164
      %p171 = scmp.eq.s32.totalorder %s20, 7
      %p172 = por %p170, %p171
      %p173 = scmp.ne.s32.totalorder %s165, %s168
      %p174 = scmp.eq.s32.totalorder %s20, 0
      %p175 = por %p173, %p174
      %p176 = scmp.ne.s32.totalorder %s165, %s168
      %p177 = scmp.eq.s32.totalorder %s25, 7
      %p178 = por %p176, %p177
      %p179 = scmp.ne.s32.totalorder %s168, %s169
      %p180 = scmp.eq.s32.totalorder %s25, 0
      %p181 = por %p179, %p180
      %p182 = scmp.ne.s32.totalorder %s168, %s169
      %p183 = scmp.eq.s32.totalorder %s26, 7
      %p184 = por %p182, %p183
      %p186 = scmp.ne.s32.totalorder %s169, %s185
      %p187 = scmp.eq.s32.totalorder %s26, 0
      %p188 = por %p186, %p187
      %p189 = scmp.le.s32.totalorder 1, %s20
      %p190 = scmp.lt.s32.totalorder %s20, 9
      %p191 = pnand %p189, %p190
      %p192 = pneg %p191
      // Predicated region
      $region9: #{tpu_custom_call.1} parent=5 // pred_check
        _
      $region10: #{tpu_custom_call.1} parent=5 // pred_check_branch
        %194 = sbr.rel (%p191) target = $region12
      $region11: #{tpu_custom_call.1} parent=5 // pred_region
        %s195 = ssub.s32 %s20, 1
        // Predicated region
        $region13: #{tpu_custom_call.1} parent=11 // pred_check
          %p196 = pneg %p153
        $region14: #{tpu_custom_call.1} parent=11 // pred_check_branch
          %198 = sbr.rel (%p196) target = $region16
        $region15: #{tpu_custom_call.1} parent=11 // pred_region
          %s200 = ssub.s32 6144, 6144
          %201 = vsyncadd [#allocation9], %s200
          %s202 = sshll.u32 [#allocation8], 4
          %s203 = int_to_ptr.vmem [resolvable:$true] %s202
          %208 = dma.hbm_to_vmem [thread:$0]  %s3, 6144, %s203, [#allocation9], 128, 128, 8
        $region16: #{tpu_custom_call.1} parent=11 // pred_fallthru
          _
      $region12: #{tpu_custom_call.1} parent=5 // pred_fallthru
        _
      %p209 = scmp.lt.s32.totalorder %s20, 8
      // Predicated region
      $region17: #{tpu_custom_call.1} parent=5 // pred_check
        %p210 = pneg %p209
      $region18: #{tpu_custom_call.1} parent=5 // pred_check_branch
        %212 = sbr.rel (%p210) target = $region20
      $region19: #{tpu_custom_call.1} parent=5 // pred_region
        // Predicated region
        $region21: #{tpu_custom_call.1} parent=19 // pred_check
          %p213 = pneg %p54
        $region22: #{tpu_custom_call.1} parent=19 // pred_check_branch
          %215 = sbr.rel (%p213) target = $region24
        $region23: #{tpu_custom_call.1} parent=19 // pred_region
          %s216 = sand.u32 %s44, 1
          %s217 = scalar_lea.sflag [#allocation3], %s216
          %s218 = sand.u32 %s44, 1
          %s219 = smul.addr %s218, 64
          %s220 = scalar_lea.vmem [#allocation2], %s219
          %s221 = smul.u32 8, %s28
          %s223 = ssub.s32 1024, 1024
          %224 = vsyncadd %s217, %s223
          %s225 = smul.addr %s27, 32
          %s226 = sadd.s32 %s221, %s225
          %s227 = smul.addr %s226, 128
          %s228 = scalar_lea.hbm %s0, %s227
          %s229 = sshll.u32 %s220, 4
          %s230 = int_to_ptr.vmem [resolvable:$true] %s229
          %235 = dma.hbm_to_vmem [thread:$0]  %s228, 1024, %s230, %s217, 128, 128, 8
        $region24: #{tpu_custom_call.1} parent=19 // pred_fallthru
          _
        // Predicated region
        $region25: #{tpu_custom_call.1} parent=19 // pred_check
          %p236 = pneg %p90
        $region26: #{tpu_custom_call.1} parent=19 // pred_check_branch
          %238 = sbr.rel (%p236) target = $region28
        $region27: #{tpu_custom_call.1} parent=19 // pred_region
          %s239 = sand.u32 %s20, 1
          %s240 = scalar_lea.sflag [#allocation6], %s239
          %s241 = sand.u32 %s80, 1
          %s242 = smul.addr %s241, 8
          %s243 = scalar_lea.vmem [#allocation5], %s242
          %s244 = smul.u32 %s28, 8
          %s245 = ssub.s32 %s244, 1
          %p246 = scmp.gt.s32.totalorder %s245, 0
          %s247 = scalar_select %p246, %s245, 0
          %s249 = ssub.s32 128, 128
          %250 = vsyncadd %s240, %s249
          %s251 = smul.addr %s27, 32
          %s252 = sadd.s32 %s247, %s251
          %s253 = smul.addr %s252, 128
          %s254 = scalar_lea.hbm %s1, %s253
          %s256 = sshll.u32 %s243, 4
          %s257 = int_to_ptr.vmem [resolvable:$true] %s256
          %259 = dma.hbm_to_vmem [thread:$0]  %s254, 128, %s257, %s240
        $region28: #{tpu_custom_call.1} parent=19 // pred_fallthru
          _
        // Predicated region
        $region29: #{tpu_custom_call.1} parent=19 // pred_check
          %p260 = pneg %p126
        $region30: #{tpu_custom_call.1} parent=19 // pred_check_branch
          %262 = sbr.rel (%p260) target = $region32
        $region31: #{tpu_custom_call.1} parent=19 // pred_region
          %s263 = sand.u32 %s20, 1
          %s264 = scalar_lea.sflag [#allocation6], %s263
          %s265 = sand.u32 %s116, 1
          %s266 = smul.addr %s265, 8
          %s267 = scalar_lea.vmem [#allocation7], %s266
          %s268 = sadd.s32 %s28, 1
          %s269 = smul.u32 %s268, 8
          %p270 = scmp.lt.s32.totalorder %s269, 31
          %s271 = scalar_select %p270, %s269, 31
          %s273 = ssub.s32 128, 128
          %274 = vsyncadd %s264, %s273
          %s275 = smul.addr %s27, 32
          %s276 = sadd.s32 %s271, %s275
          %s277 = smul.addr %s276, 128
          %s278 = scalar_lea.hbm %s2, %s277
          %s280 = sshll.u32 %s267, 4
          %s281 = int_to_ptr.vmem [resolvable:$true] %s280
          %283 = dma.hbm_to_vmem [thread:$0]  %s278, 128, %s281, %s264
        $region32: #{tpu_custom_call.1} parent=19 // pred_fallthru
          _
      $region20: #{tpu_custom_call.1} parent=5 // pred_fallthru
        _
      %p284 = scmp.le.s32.totalorder 1, %s20
      %p285 = scmp.lt.s32.totalorder %s20, 9
      %p286 = pnand %p284, %p285
      %p287 = pneg %p286
      // Predicated region
      $region33: #{tpu_custom_call.1} parent=5 // pred_check
        _
      $region34: #{tpu_custom_call.1} parent=5 // pred_check_branch
        %289 = sbr.rel (%p286) target = $region36
      $region35: #{tpu_custom_call.1} parent=5 // pred_region
        %s290 = ssub.s32 %s20, 1
        %s291 = sand.u32 %s47, 1
        %s292 = scalar_lea.sflag [#allocation3], %s291
        %s293 = sand.u32 %s47, 1
        %s294 = smul.addr %s293, 64
        %s295 = scalar_lea.vmem [#allocation2], %s294
        // Predicated region
        $region37: #{tpu_custom_call.1} parent=35 // pred_check
          %p296 = pneg %p60
        $region38: #{tpu_custom_call.1} parent=35 // pred_check_branch
          %298 = sbr.rel (%p296) target = $region40
        $region39: #{tpu_custom_call.1} parent=35 // pred_region
          %299 = dma.done %s292, 1024
        $region40: #{tpu_custom_call.1} parent=35 // pred_fallthru
          _
        %s300 = sand.u32 %s25, 1
        %s301 = scalar_lea.sflag [#allocation6], %s300
        %s302 = sand.u32 %s83, 1
        %s303 = smul.addr %s302, 8
        %s304 = scalar_lea.vmem [#allocation5], %s303
        // Predicated region
        $region41: #{tpu_custom_call.1} parent=35 // pred_check
          %p305 = pneg %p96
        $region42: #{tpu_custom_call.1} parent=35 // pred_check_branch
          %307 = sbr.rel (%p305) target = $region44
        $region43: #{tpu_custom_call.1} parent=35 // pred_region
          %308 = dma.done %s301, 128
        $region44: #{tpu_custom_call.1} parent=35 // pred_fallthru
          _
        %s309 = sand.u32 %s25, 1
        %s310 = scalar_lea.sflag [#allocation6], %s309
        %s311 = sand.u32 %s119, 1
        %s312 = smul.addr %s311, 8
        %s313 = scalar_lea.vmem [#allocation7], %s312
        // Predicated region
        $region45: #{tpu_custom_call.1} parent=35 // pred_check
          %p314 = pneg %p132
        $region46: #{tpu_custom_call.1} parent=35 // pred_check_branch
          %316 = sbr.rel (%p314) target = $region48
        $region47: #{tpu_custom_call.1} parent=35 // pred_region
          %317 = dma.done %s310, 128
        $region48: #{tpu_custom_call.1} parent=35 // pred_fallthru
          _
        // Predicated region
        $region49: #{tpu_custom_call.1} parent=35 // pred_check
          %p318 = pneg %p153
        $region50: #{tpu_custom_call.1} parent=35 // pred_check_branch
          %320 = sbr.rel (%p318) target = $region52
        $region51: #{tpu_custom_call.1} parent=35 // pred_region
          %321 = dma.done [#allocation9], 6144
        $region52: #{tpu_custom_call.1} parent=35 // pred_fallthru
          _
        %s322 = sand.u32 %s47, 1
        %s323 = scalar_lea.sflag [#allocation3], %s322
        %s324 = sand.u32 %s47, 1
        %s325 = smul.addr %s324, 64
        %s326 = scalar_lea.vmem [#allocation2], %s325
        %p327 = pneg %p60
        %p328 = pneg %p57
        %s329 = sand.u32 %s25, 1
        %s330 = scalar_lea.sflag [#allocation6], %s329
        %s331 = sand.u32 %s83, 1
        %s332 = smul.addr %s331, 8
        %s333 = scalar_lea.vmem [#allocation5], %s332
        %p334 = pneg %p96
        %p335 = pneg %p93
        %s336 = sand.u32 %s25, 1
        %s337 = scalar_lea.sflag [#allocation6], %s336
        %s338 = sand.u32 %s119, 1
        %s339 = smul.addr %s338, 8
        %s340 = scalar_lea.vmem [#allocation7], %s339
        %p341 = pneg %p132
        %p342 = pneg %p129
        %p343 = pneg %p153
        %p344 = pneg %p150
        %p345 = pneg %p181
        %p346 = pneg %p178
        %s347 = sand.u32 %s168, 1
        %s348 = scalar_lea.sflag [#allocation4], %s347
        %s349 = sand.u32 %s168, 1
        %s350 = smul.addr %s349, 64
        %s351 = scalar_lea.vmem [#allocation10], %s350
        %s352 = smul.u32 8, %s30
        %s353 = smul.u32 %s30, 8
        %s354 = ssub.s32 %s353, 1
        %p355 = scmp.gt.s32.totalorder %s354, 0
        %s356 = scalar_select %p355, %s354, 0
        %s357 = sadd.s32 %s30, 1
        %s358 = smul.u32 %s357, 8
        %p359 = scmp.lt.s32.totalorder %s358, 31
        %s360 = scalar_select %p359, %s358, 31
        %s361 = smul.u32 8, %s30
        %v363 = vld [vmem:[%s295] sm:$0xff]
        %v364 = vld [vmem:[%s295 + $0x8] sm:$0xff]
        %v365 = vld [vmem:[%s295 + $0x10] sm:$0xff]
        %v366 = vld [vmem:[%s295 + $0x18] sm:$0xff]
        %v367 = vld [vmem:[%s295 + $0x20] sm:$0xff]
        %v368 = vld [vmem:[%s295 + $0x28] sm:$0xff]
        %v369 = vld [vmem:[%s295 + $0x30] sm:$0xff]
        %v370 = vld [vmem:[%s295 + $0x38] sm:$0xff]
        %v371 = vld [vmem:[%s304] sm:$0xff]
        %v372 = vld [vmem:[%s313] sm:$0xff]
        %v373 = vlaneseq
        %v374 = vshrl.u32 %v373, 7
        %v375 = vadd.s32 %v374, 8
        %v376 = vadd.s32 %v374, 16
        %v377 = vadd.s32 %v374, 24
        %v378 = vadd.s32 %v374, 32
        %v379 = vadd.s32 %v374, 40
        %v380 = vadd.s32 %v374, 48
        %v381 = vadd.s32 %v374, 56
        %v382 = vrot.slane %v363, 7
        %v383 = vrot.slane %v364, 7
        %v384 = vrot.slane %v365, 7
        %v385 = vrot.slane %v366, 7
        %v386 = vrot.slane %v367, 7
        %v387 = vrot.slane %v368, 7
        %v388 = vrot.slane %v369, 7
        %v389 = vrot.slane %v370, 7
        %vm390 = vcmp.lt.s32.totalorder %v374, 1
        %v391 = vsel %vm390, %v388, %v389
        %v392 = vsel %vm390, %v387, %v388
        %v393 = vsel %vm390, %v386, %v387
        %v394 = vsel %vm390, %v385, %v386
        %v395 = vsel %vm390, %v384, %v385
        %v396 = vsel %vm390, %v383, %v384
        %v397 = vsel %vm390, %v382, %v383
        %v398 = vsel %vm390, %v389, %v382
        %v399 = vrot.slane %v371, 7
        %vm400 = vcmp.lt.s32.totalorder %v375, 1
        %vm401 = vcmp.lt.s32.totalorder %v376, 1
        %vm402 = vcmp.lt.s32.totalorder %v377, 1
        %vm403 = vcmp.lt.s32.totalorder %v378, 1
        %vm404 = vcmp.lt.s32.totalorder %v379, 1
        %vm405 = vcmp.lt.s32.totalorder %v380, 1
        %vm406 = vcmp.lt.s32.totalorder %v381, 1
        %p407 = scmp.gt.s32.totalorder %s30, 0
        %s408 = scalar_select %p407, 1, 0
        %v409 = vstv %s408
        %vm410 = vcmp.eq.s32.totalorder %v409, 1
        %v411 = vsel %vm410, %v399, 0.0
        %v412 = vsel %vm390, 1, 0
        %v413 = vsel %vm400, 1, 0
        %v414 = vsel %vm401, 1, 0
        %v415 = vsel %vm402, 1, 0
        %v416 = vsel %vm403, 1, 0
        %v417 = vsel %vm404, 1, 0
        %v418 = vsel %vm405, 1, 0
        %v419 = vsel %vm406, 1, 0
        %vm420 = vcmp.eq.s32.totalorder %v412, 1
        %vm421 = vcmp.eq.s32.totalorder %v413, 1
        %vm422 = vcmp.eq.s32.totalorder %v414, 1
        %vm423 = vcmp.eq.s32.totalorder %v415, 1
        %vm424 = vcmp.eq.s32.totalorder %v416, 1
        %vm425 = vcmp.eq.s32.totalorder %v417, 1
        %vm426 = vcmp.eq.s32.totalorder %v418, 1
        %vm427 = vcmp.eq.s32.totalorder %v419, 1
        %v428 = vsel %vm420, %v411, %v398
        %v429 = vsel %vm421, 0.0, %v397
        %v430 = vsel %vm422, 0.0, %v396
        %v431 = vsel %vm423, 0.0, %v395
        %v432 = vsel %vm424, 0.0, %v394
        %v433 = vsel %vm425, 0.0, %v393
        %v434 = vsel %vm426, 0.0, %v392
        %v435 = vsel %vm427, 0.0, %v391
        %v436 = vpack.c.bf16 %v429, %v428
        %v437 = vpack.c.bf16 %v431, %v430
        %v438 = vpack.c.bf16 %v433, %v432
        %v439 = vpack.c.bf16 %v435, %v434
        %v440 = vld [vmem:[#allocation8] sm:$0xff]
        %v441 = vld [vmem:[#allocation8 + $0x8] sm:$0xff]
        %v442 = vld [vmem:[#allocation8 + $0x10] sm:$0xff]
        %v443 = vld [vmem:[#allocation8 + $0x18] sm:$0xff]
        %v444 = vld [vmem:[#allocation8 + $0x20] sm:$0xff]
        %v445 = vld [vmem:[#allocation8 + $0x28] sm:$0xff]
        %v446 = vld [vmem:[#allocation8 + $0x30] sm:$0xff]
        %v447 = vld [vmem:[#allocation8 + $0x38] sm:$0xff]
        %v448 = vld [vmem:[#allocation8 + $0x40] sm:$0xff]
        %v449 = vld [vmem:[#allocation8 + $0x48] sm:$0xff]
        %v450 = vld [vmem:[#allocation8 + $0x50] sm:$0xff]
        %v451 = vld [vmem:[#allocation8 + $0x58] sm:$0xff]
        %v452 = vld [vmem:[#allocation8 + $0x60] sm:$0xff]
        %v453 = vld [vmem:[#allocation8 + $0x68] sm:$0xff]
        %v454 = vld [vmem:[#allocation8 + $0x70] sm:$0xff]
        %v455 = vld [vmem:[#allocation8 + $0x78] sm:$0xff]
        %v456 = vpack.c.bf16 %v364, %v363
        %v457 = vpack.c.bf16 %v366, %v365
        %v458 = vpack.c.bf16 %v368, %v367
        %v459 = vpack.c.bf16 %v370, %v369
        %s460 = scalar_lea.vmem [#allocation8], 128
        %v461 = vld [vmem:[%s460] sm:$0xff]
        %v462 = vld [vmem:[%s460 + $0x8] sm:$0xff]
        %v463 = vld [vmem:[%s460 + $0x10] sm:$0xff]
        %v464 = vld [vmem:[%s460 + $0x18] sm:$0xff]
        %v465 = vld [vmem:[%s460 + $0x20] sm:$0xff]
        %v466 = vld [vmem:[%s460 + $0x28] sm:$0xff]
        %v467 = vld [vmem:[%s460 + $0x30] sm:$0xff]
        %v468 = vld [vmem:[%s460 + $0x38] sm:$0xff]
        %v469 = vld [vmem:[%s460 + $0x40] sm:$0xff]
        %v470 = vld [vmem:[%s460 + $0x48] sm:$0xff]
        %v471 = vld [vmem:[%s460 + $0x50] sm:$0xff]
        %v472 = vld [vmem:[%s460 + $0x58] sm:$0xff]
        %v473 = vld [vmem:[%s460 + $0x60] sm:$0xff]
        %v474 = vld [vmem:[%s460 + $0x68] sm:$0xff]
        %v475 = vld [vmem:[%s460 + $0x70] sm:$0xff]
        %v476 = vld [vmem:[%s460 + $0x78] sm:$0xff]
        %v493 = vunpack.c.l.b16 %v461
        %v494 = vunpack.c.h.b16 %v461
        %v495 = vunpack.c.l.b16 %v462
        %v496 = vunpack.c.h.b16 %v462
        %v497 = vunpack.c.l.b16 %v463
        %v498 = vunpack.c.h.b16 %v463
        %v499 = vunpack.c.l.b16 %v464
        %v500 = vunpack.c.h.b16 %v464
        %v501 = vunpack.c.l.b16 %v465
        %v502 = vunpack.c.h.b16 %v465
        %v503 = vunpack.c.l.b16 %v466
        %v504 = vunpack.c.h.b16 %v466
        %v505 = vunpack.c.l.b16 %v467
        %v506 = vunpack.c.h.b16 %v467
        %v507 = vunpack.c.l.b16 %v468
        %v508 = vunpack.c.h.b16 %v468
        %v509 = vunpack.c.l.b16 %v469
        %v510 = vunpack.c.h.b16 %v469
        %v511 = vunpack.c.l.b16 %v470
        %v512 = vunpack.c.h.b16 %v470
        %v513 = vunpack.c.l.b16 %v471
        %v514 = vunpack.c.h.b16 %v471
        %v515 = vunpack.c.l.b16 %v472
        %v516 = vunpack.c.h.b16 %v472
        %v517 = vunpack.c.l.b16 %v473
        %v518 = vunpack.c.h.b16 %v473
        %v519 = vunpack.c.l.b16 %v474
        %v520 = vunpack.c.h.b16 %v474
        %v521 = vunpack.c.l.b16 %v475
        %v522 = vunpack.c.h.b16 %v475
        %v523 = vunpack.c.l.b16 %v476
        %v524 = vunpack.c.h.b16 %v476
        %v525 = vpack.c.b16 %v495, %v493
        %v526 = vpack.c.b16 %v496, %v494
        %v527 = vpack.c.b16 %v499, %v497
        %v528 = vpack.c.b16 %v500, %v498
        %v529 = vpack.c.b16 %v503, %v501
        %v530 = vpack.c.b16 %v504, %v502
        %v531 = vpack.c.b16 %v507, %v505
        %v532 = vpack.c.b16 %v508, %v506
        %v533 = vpack.c.b16 %v511, %v509
        %v534 = vpack.c.b16 %v512, %v510
        %v535 = vpack.c.b16 %v515, %v513
        %v536 = vpack.c.b16 %v516, %v514
        %v537 = vpack.c.b16 %v519, %v517
        %v538 = vpack.c.b16 %v520, %v518
        %v539 = vpack.c.b16 %v523, %v521
        %v540 = vpack.c.b16 %v524, %v522
        %557 = vmatprep.subr.bf16.mxu0 %v526
        %558 = vmatpush1.bf16.msra.mxu0 %v525
        %559 = vmatprep.subr.bf16.mxu0 %v528
        %560 = vmatpush1.bf16.msra.mxu0 %v527
        %561 = vmatprep.subr.bf16.mxu0 %v530
        %562 = vmatpush1.bf16.msra.mxu0 %v529
        %563 = vmatprep.subr.bf16.mxu0 %v532
        %564 = vmatpush1.bf16.msra.mxu0 %v531
        %565 = vmatprep.subr.bf16.mxu0 %v534
        %566 = vmatpush1.bf16.msra.mxu0 %v533
        %567 = vmatprep.subr.bf16.mxu0 %v536
        %568 = vmatpush1.bf16.msra.mxu0 %v535
        %569 = vmatprep.subr.bf16.mxu0 %v538
        %570 = vmatpush1.bf16.msra.mxu0 %v537
        %571 = vmatprep.subr.bf16.mxu0 %v540
        %572 = vmatpush1.bf16.msra.mxu0 %v539
        %573 = vmatprep.subr.bf16.mxu0 0
        %574 = vmatpush1.bf16.msra.mxu0 0
        %575 = vmatprep.subr.bf16.mxu0 0
        %576 = vmatpush1.bf16.msra.mxu0 0
        %577 = vmatprep.subr.bf16.mxu0 0
        %578 = vmatpush1.bf16.msra.mxu0 0
        %579 = vmatprep.subr.bf16.mxu0 0
        %580 = vmatpush1.bf16.msra.mxu0 0
        %581 = vmatprep.subr.bf16.mxu0 0
        %582 = vmatpush1.bf16.msra.mxu0 0
        %583 = vmatprep.subr.bf16.mxu0 0
        %584 = vmatpush1.bf16.msra.mxu0 0
        %585 = vmatprep.subr.bf16.mxu0 0
        %586 = vmatpush1.bf16.msra.mxu0 0
        %587 = vmatprep.subr.bf16.mxu0 0
        %588 = vmatpush1.bf16.msra.mxu0 0
        %589 = vmatprep.mubr.bf16.mxu0 0
        %590 = vmatmul.mubr.bf16.gmra.mrb[0].mxu0 %v456
        %v591 = vpop.f32.mrb[0].mxu0
        %v592 = vadd.f32 0.0, %v591
        %v593 = vpop.f32.mrb[0].mxu0
        %v594 = vadd.f32 0.0, %v593
        %v595 = vpop.f32.mrb[0].mxu0
        %v596 = vadd.f32 0.0, %v595
        %v597 = vpop.f32.mrb[0].mxu0
        %v598 = vadd.f32 0.0, %v597
        %599 = vmatprep.mubr.bf16.mxu0 0
        %600 = vmatmul.mubr.bf16.gmra.mrb[0].mxu0 %v457
        %v601 = vpop.f32.mrb[0].mxu0
        %v602 = vadd.f32 0.0, %v601
        %v603 = vpop.f32.mrb[0].mxu0
        %v604 = vadd.f32 0.0, %v603
        %v605 = vpop.f32.mrb[0].mxu0
        %v606 = vadd.f32 0.0, %v605
        %v607 = vpop.f32.mrb[0].mxu0
        %v608 = vadd.f32 0.0, %v607
        %609 = vmatprep.mubr.bf16.mxu0 0
        %610 = vmatmul.mubr.bf16.gmra.mrb[0].mxu0 %v458
        %v611 = vpop.f32.mrb[0].mxu0
        %v612 = vadd.f32 0.0, %v611
        %v613 = vpop.f32.mrb[0].mxu0
        %v614 = vadd.f32 0.0, %v613
        %v615 = vpop.f32.mrb[0].mxu0
        %v616 = vadd.f32 0.0, %v615
        %v617 = vpop.f32.mrb[0].mxu0
        %v618 = vadd.f32 0.0, %v617
        %619 = vmatprep.mubr.bf16.mxu0 0
        %620 = vmatmul.mubr.bf16.gmra.mrb[0].mxu0 %v459
        %v621 = vpop.f32.mrb[0].mxu0
        %v622 = vadd.f32 0.0, %v621
        %v623 = vpop.f32.mrb[0].mxu0
        %v624 = vadd.f32 0.0, %v623
        %v625 = vpop.f32.mrb[0].mxu0
        %v626 = vadd.f32 0.0, %v625
        %v627 = vpop.f32.mrb[0].mxu0
        %v628 = vadd.f32 0.0, %v627
        %629 = vdwg.mxu0
        %v646 = vunpack.c.l.b16 %v440
        %v647 = vunpack.c.h.b16 %v440
        %v648 = vunpack.c.l.b16 %v441
        %v649 = vunpack.c.h.b16 %v441
        %v650 = vunpack.c.l.b16 %v442
        %v651 = vunpack.c.h.b16 %v442
        %v652 = vunpack.c.l.b16 %v443
        %v653 = vunpack.c.h.b16 %v443
        %v654 = vunpack.c.l.b16 %v444
        %v655 = vunpack.c.h.b16 %v444
        %v656 = vunpack.c.l.b16 %v445
        %v657 = vunpack.c.h.b16 %v445
        %v658 = vunpack.c.l.b16 %v446
        %v659 = vunpack.c.h.b16 %v446
        %v660 = vunpack.c.l.b16 %v447
        %v661 = vunpack.c.h.b16 %v447
        %v662 = vunpack.c.l.b16 %v448
        %v663 = vunpack.c.h.b16 %v448
        %v664 = vunpack.c.l.b16 %v449
        %v665 = vunpack.c.h.b16 %v449
        %v666 = vunpack.c.l.b16 %v450
        %v667 = vunpack.c.h.b16 %v450
        %v668 = vunpack.c.l.b16 %v451
        %v669 = vunpack.c.h.b16 %v451
        %v670 = vunpack.c.l.b16 %v452
        %v671 = vunpack.c.h.b16 %v452
        %v672 = vunpack.c.l.b16 %v453
        %v673 = vunpack.c.h.b16 %v453
        %v674 = vunpack.c.l.b16 %v454
        %v675 = vunpack.c.h.b16 %v454
        %v676 = vunpack.c.l.b16 %v455
        %v677 = vunpack.c.h.b16 %v455
        %v678 = vpack.c.b16 %v648, %v646
        %v679 = vpack.c.b16 %v649, %v647
        %v680 = vpack.c.b16 %v652, %v650
        %v681 = vpack.c.b16 %v653, %v651
        %v682 = vpack.c.b16 %v656, %v654
        %v683 = vpack.c.b16 %v657, %v655
        %v684 = vpack.c.b16 %v660, %v658
        %v685 = vpack.c.b16 %v661, %v659
        %v686 = vpack.c.b16 %v664, %v662
        %v687 = vpack.c.b16 %v665, %v663
        %v688 = vpack.c.b16 %v668, %v666
        %v689 = vpack.c.b16 %v669, %v667
        %v690 = vpack.c.b16 %v672, %v670
        %v691 = vpack.c.b16 %v673, %v671
        %v692 = vpack.c.b16 %v676, %v674
        %v693 = vpack.c.b16 %v677, %v675
        %710 = vmatprep.subr.bf16.mxu0 %v679
        %711 = vmatpush1.bf16.msra.mxu0 %v678
        %712 = vmatprep.subr.bf16.mxu0 %v681
        %713 = vmatpush1.bf16.msra.mxu0 %v680
        %714 = vmatprep.subr.bf16.mxu0 %v683
        %715 = vmatpush1.bf16.msra.mxu0 %v682
        %716 = vmatprep.subr.bf16.mxu0 %v685
        %717 = vmatpush1.bf16.msra.mxu0 %v684
        %718 = vmatprep.subr.bf16.mxu0 %v687
        %719 = vmatpush1.bf16.msra.mxu0 %v686
        %720 = vmatprep.subr.bf16.mxu0 %v689
        %721 = vmatpush1.bf16.msra.mxu0 %v688
        %722 = vmatprep.subr.bf16.mxu0 %v691
        %723 = vmatpush1.bf16.msra.mxu0 %v690
        %724 = vmatprep.subr.bf16.mxu0 %v693
        %725 = vmatpush1.bf16.msra.mxu0 %v692
        %726 = vmatprep.subr.bf16.mxu0 0
        %727 = vmatpush1.bf16.msra.mxu0 0
        %728 = vmatprep.subr.bf16.mxu0 0
        %729 = vmatpush1.bf16.msra.mxu0 0
        %730 = vmatprep.subr.bf16.mxu0 0
        %731 = vmatpush1.bf16.msra.mxu0 0
        %732 = vmatprep.subr.bf16.mxu0 0
        %733 = vmatpush1.bf16.msra.mxu0 0
        %734 = vmatprep.subr.bf16.mxu0 0
        %735 = vmatpush1.bf16.msra.mxu0 0
        %736 = vmatprep.subr.bf16.mxu0 0
        %737 = vmatpush1.bf16.msra.mxu0 0
        %738 = vmatprep.subr.bf16.mxu0 0
        %739 = vmatpush1.bf16.msra.mxu0 0
        %740 = vmatprep.subr.bf16.mxu0 0
        %741 = vmatpush1.bf16.msra.mxu0 0
        %742 = vmatprep.mubr.bf16.mxu0 0
        %743 = vmatmul.mubr.bf16.gmra.mrb[0].mxu0 %v436
        %v744 = vpop.f32.mrb[0].mxu0
        %v745 = vadd.f32 %v592, %v744
        %v746 = vpop.f32.mrb[0].mxu0
        %v747 = vadd.f32 %v594, %v746
        %v748 = vpop.f32.mrb[0].mxu0
        %v749 = vadd.f32 %v596, %v748
        %v750 = vpop.f32.mrb[0].mxu0
        %v751 = vadd.f32 %v598, %v750
        %752 = vmatprep.mubr.bf16.mxu0 0
        %753 = vmatmul.mubr.bf16.gmra.mrb[0].mxu0 %v437
        %v754 = vpop.f32.mrb[0].mxu0
        %v755 = vadd.f32 %v602, %v754
        %v756 = vpop.f32.mrb[0].mxu0
        %v757 = vadd.f32 %v604, %v756
        %v758 = vpop.f32.mrb[0].mxu0
        %v759 = vadd.f32 %v606, %v758
        %v760 = vpop.f32.mrb[0].mxu0
        %v761 = vadd.f32 %v608, %v760
        %762 = vmatprep.mubr.bf16.mxu0 0
        %763 = vmatmul.mubr.bf16.gmra.mrb[0].mxu0 %v438
        %v764 = vpop.f32.mrb[0].mxu0
        %v765 = vadd.f32 %v612, %v764
        %v766 = vpop.f32.mrb[0].mxu0
        %v767 = vadd.f32 %v614, %v766
        %v768 = vpop.f32.mrb[0].mxu0
        %v769 = vadd.f32 %v616, %v768
        %v770 = vpop.f32.mrb[0].mxu0
        %v771 = vadd.f32 %v618, %v770
        %772 = vmatprep.mubr.bf16.mxu0 0
        %773 = vmatmul.mubr.bf16.gmra.mrb[0].mxu0 %v439
        %v774 = vpop.f32.mrb[0].mxu0
        %v775 = vadd.f32 %v622, %v774
        %v776 = vpop.f32.mrb[0].mxu0
        %v777 = vadd.f32 %v624, %v776
        %v778 = vpop.f32.mrb[0].mxu0
        %v779 = vadd.f32 %v626, %v778
        %v780 = vpop.f32.mrb[0].mxu0
        %v781 = vadd.f32 %v628, %v780
        %782 = vdwg.mxu0
        %v783 = vrot.slane %v363, 1
        %v784 = vrot.slane %v364, 1
        %v785 = vrot.slane %v365, 1
        %v786 = vrot.slane %v366, 1
        %v787 = vrot.slane %v367, 1
        %v788 = vrot.slane %v368, 1
        %v789 = vrot.slane %v369, 1
        %v790 = vrot.slane %v370, 1
        %vm791 = vcmp.lt.s32.totalorder %v374, 7
        %v792 = vsel %vm791, %v789, %v790
        %v793 = vsel %vm791, %v788, %v789
        %v794 = vsel %vm791, %v787, %v788
        %v795 = vsel %vm791, %v786, %v787
        %v796 = vsel %vm791, %v785, %v786
        %v797 = vsel %vm791, %v784, %v785
        %v798 = vsel %vm791, %v783, %v784
        %v799 = vsel %vm791, %v790, %v783
        %v800 = vrot.slane %v372, 1
        %vm801 = vcmp.ge.s32.totalorder %v374, 63
        %vm802 = vcmp.ge.s32.totalorder %v375, 63
        %vm803 = vcmp.ge.s32.totalorder %v376, 63
        %vm804 = vcmp.ge.s32.totalorder %v377, 63
        %vm805 = vcmp.ge.s32.totalorder %v378, 63
        %vm806 = vcmp.ge.s32.totalorder %v379, 63
        %vm807 = vcmp.ge.s32.totalorder %v380, 63
        %vm808 = vcmp.ge.s32.totalorder %v381, 63
        %p809 = scmp.lt.s32.totalorder %s30, 3
        %s810 = scalar_select %p809, 1, 0
        %v811 = vstv %s810
        %vm812 = vcmp.eq.s32.totalorder %v811, 1
        %v813 = vsel %vm812, %v800, 0.0
        %v814 = vsel %vm801, 1, 0
        %v815 = vsel %vm802, 1, 0
        %v816 = vsel %vm803, 1, 0
        %v817 = vsel %vm804, 1, 0
        %v818 = vsel %vm805, 1, 0
        %v819 = vsel %vm806, 1, 0
        %v820 = vsel %vm807, 1, 0
        %v821 = vsel %vm808, 1, 0
        %vm822 = vcmp.eq.s32.totalorder %v814, 1
        %vm823 = vcmp.eq.s32.totalorder %v815, 1
        %vm824 = vcmp.eq.s32.totalorder %v816, 1
        %vm825 = vcmp.eq.s32.totalorder %v817, 1
        %vm826 = vcmp.eq.s32.totalorder %v818, 1
        %vm827 = vcmp.eq.s32.totalorder %v819, 1
        %vm828 = vcmp.eq.s32.totalorder %v820, 1
        %vm829 = vcmp.eq.s32.totalorder %v821, 1
        %v830 = vsel %vm822, 0.0, %v798
        %v831 = vsel %vm823, 0.0, %v797
        %v832 = vsel %vm824, 0.0, %v796
        %v833 = vsel %vm825, 0.0, %v795
        %v834 = vsel %vm826, 0.0, %v794
        %v835 = vsel %vm827, 0.0, %v793
        %v836 = vsel %vm828, 0.0, %v792
        %v837 = vsel %vm829, %v813, %v799
        %v838 = vpack.c.bf16 %v831, %v830
        %v839 = vpack.c.bf16 %v833, %v832
        %v840 = vpack.c.bf16 %v835, %v834
        %v841 = vpack.c.bf16 %v837, %v836
        %s842 = scalar_lea.vmem [#allocation8], 256
        %v843 = vld [vmem:[%s842] sm:$0xff]
        %v844 = vld [vmem:[%s842 + $0x8] sm:$0xff]
        %v845 = vld [vmem:[%s842 + $0x10] sm:$0xff]
        %v846 = vld [vmem:[%s842 + $0x18] sm:$0xff]
        %v847 = vld [vmem:[%s842 + $0x20] sm:$0xff]
        %v848 = vld [vmem:[%s842 + $0x28] sm:$0xff]
        %v849 = vld [vmem:[%s842 + $0x30] sm:$0xff]
        %v850 = vld [vmem:[%s842 + $0x38] sm:$0xff]
        %v851 = vld [vmem:[%s842 + $0x40] sm:$0xff]
        %v852 = vld [vmem:[%s842 + $0x48] sm:$0xff]
        %v853 = vld [vmem:[%s842 + $0x50] sm:$0xff]
        %v854 = vld [vmem:[%s842 + $0x58] sm:$0xff]
        %v855 = vld [vmem:[%s842 + $0x60] sm:$0xff]
        %v856 = vld [vmem:[%s842 + $0x68] sm:$0xff]
        %v857 = vld [vmem:[%s842 + $0x70] sm:$0xff]
        %v858 = vld [vmem:[%s842 + $0x78] sm:$0xff]
        %v875 = vunpack.c.l.b16 %v843
        %v876 = vunpack.c.h.b16 %v843
        %v877 = vunpack.c.l.b16 %v844
        %v878 = vunpack.c.h.b16 %v844
        %v879 = vunpack.c.l.b16 %v845
        %v880 = vunpack.c.h.b16 %v845
        %v881 = vunpack.c.l.b16 %v846
        %v882 = vunpack.c.h.b16 %v846
        %v883 = vunpack.c.l.b16 %v847
        %v884 = vunpack.c.h.b16 %v847
        %v885 = vunpack.c.l.b16 %v848
        %v886 = vunpack.c.h.b16 %v848
        %v887 = vunpack.c.l.b16 %v849
        %v888 = vunpack.c.h.b16 %v849
        %v889 = vunpack.c.l.b16 %v850
        %v890 = vunpack.c.h.b16 %v850
        %v891 = vunpack.c.l.b16 %v851
        %v892 = vunpack.c.h.b16 %v851
        %v893 = vunpack.c.l.b16 %v852
        %v894 = vunpack.c.h.b16 %v852
        %v895 = vunpack.c.l.b16 %v853
        %v896 = vunpack.c.h.b16 %v853
        %v897 = vunpack.c.l.b16 %v854
        %v898 = vunpack.c.h.b16 %v854
        %v899 = vunpack.c.l.b16 %v855
        %v900 = vunpack.c.h.b16 %v855
        %v901 = vunpack.c.l.b16 %v856
        %v902 = vunpack.c.h.b16 %v856
        %v903 = vunpack.c.l.b16 %v857
        %v904 = vunpack.c.h.b16 %v857
        %v905 = vunpack.c.l.b16 %v858
        %v906 = vunpack.c.h.b16 %v858
        %v907 = vpack.c.b16 %v877, %v875
        %v908 = vpack.c.b16 %v878, %v876
        %v909 = vpack.c.b16 %v881, %v879
        %v910 = vpack.c.b16 %v882, %v880
        %v911 = vpack.c.b16 %v885, %v883
        %v912 = vpack.c.b16 %v886, %v884
        %v913 = vpack.c.b16 %v889, %v887
        %v914 = vpack.c.b16 %v890, %v888
        %v915 = vpack.c.b16 %v893, %v891
        %v916 = vpack.c.b16 %v894, %v892
        %v917 = vpack.c.b16 %v897, %v895
        %v918 = vpack.c.b16 %v898, %v896
        %v919 = vpack.c.b16 %v901, %v899
        %v920 = vpack.c.b16 %v902, %v900
        %v921 = vpack.c.b16 %v905, %v903
        %v922 = vpack.c.b16 %v906, %v904
        %939 = vmatprep.subr.bf16.mxu0 %v908
        %940 = vmatpush1.bf16.msra.mxu0 %v907
        %941 = vmatprep.subr.bf16.mxu0 %v910
        %942 = vmatpush1.bf16.msra.mxu0 %v909
        %943 = vmatprep.subr.bf16.mxu0 %v912
        %944 = vmatpush1.bf16.msra.mxu0 %v911
        %945 = vmatprep.subr.bf16.mxu0 %v914
        %946 = vmatpush1.bf16.msra.mxu0 %v913
        %947 = vmatprep.subr.bf16.mxu0 %v916
        %948 = vmatpush1.bf16.msra.mxu0 %v915
        %949 = vmatprep.subr.bf16.mxu0 %v918
        %950 = vmatpush1.bf16.msra.mxu0 %v917
        %951 = vmatprep.subr.bf16.mxu0 %v920
        %952 = vmatpush1.bf16.msra.mxu0 %v919
        %953 = vmatprep.subr.bf16.mxu0 %v922
        %954 = vmatpush1.bf16.msra.mxu0 %v921
        %955 = vmatprep.subr.bf16.mxu0 0
        %956 = vmatpush1.bf16.msra.mxu0 0
        %957 = vmatprep.subr.bf16.mxu0 0
        %958 = vmatpush1.bf16.msra.mxu0 0
        %959 = vmatprep.subr.bf16.mxu0 0
        %960 = vmatpush1.bf16.msra.mxu0 0
        %961 = vmatprep.subr.bf16.mxu0 0
        %962 = vmatpush1.bf16.msra.mxu0 0
        %963 = vmatprep.subr.bf16.mxu0 0
        %964 = vmatpush1.bf16.msra.mxu0 0
        %965 = vmatprep.subr.bf16.mxu0 0
        %966 = vmatpush1.bf16.msra.mxu0 0
        %967 = vmatprep.subr.bf16.mxu0 0
        %968 = vmatpush1.bf16.msra.mxu0 0
        %969 = vmatprep.subr.bf16.mxu0 0
        %970 = vmatpush1.bf16.msra.mxu0 0
        %971 = vmatprep.mubr.bf16.mxu0 0
        %972 = vmatmul.mubr.bf16.gmra.mrb[0].mxu0 %v838
        %v973 = vpop.f32.mrb[0].mxu0
        %v974 = vadd.f32 0.0, %v973
        %v975 = vpop.f32.mrb[0].mxu0
        %v976 = vadd.f32 0.0, %v975
        %v977 = vpop.f32.mrb[0].mxu0
        %v978 = vadd.f32 0.0, %v977
        %v979 = vpop.f32.mrb[0].mxu0
        %v980 = vadd.f32 0.0, %v979
        %981 = vmatprep.mubr.bf16.mxu0 0
        %982 = vmatmul.mubr.bf16.gmra.mrb[0].mxu0 %v839
        %v983 = vpop.f32.mrb[0].mxu0
        %v984 = vadd.f32 0.0, %v983
        %v985 = vpop.f32.mrb[0].mxu0
        %v986 = vadd.f32 0.0, %v985
        %v987 = vpop.f32.mrb[0].mxu0
        %v988 = vadd.f32 0.0, %v987
        %v989 = vpop.f32.mrb[0].mxu0
        %v990 = vadd.f32 0.0, %v989
        %991 = vmatprep.mubr.bf16.mxu0 0
        %992 = vmatmul.mubr.bf16.gmra.mrb[0].mxu0 %v840
        %v993 = vpop.f32.mrb[0].mxu0
        %v994 = vadd.f32 0.0, %v993
        %v995 = vpop.f32.mrb[0].mxu0
        %v996 = vadd.f32 0.0, %v995
        %v997 = vpop.f32.mrb[0].mxu0
        %v998 = vadd.f32 0.0, %v997
        %v999 = vpop.f32.mrb[0].mxu0
        %v1000 = vadd.f32 0.0, %v999
        %1001 = vmatprep.mubr.bf16.mxu0 0
        %1002 = vmatmul.mubr.bf16.gmra.mrb[0].mxu0 %v841
        %v1003 = vpop.f32.mrb[0].mxu0
        %v1004 = vadd.f32 0.0, %v1003
        %v1005 = vpop.f32.mrb[0].mxu0
        %v1006 = vadd.f32 0.0, %v1005
        %v1007 = vpop.f32.mrb[0].mxu0
        %v1008 = vadd.f32 0.0, %v1007
        %v1009 = vpop.f32.mrb[0].mxu0
        %v1010 = vadd.f32 0.0, %v1009
        %1011 = vdwg.mxu0
        %v1012 = vadd.f32 %v745, %v974
        %v1013 = vadd.f32 %v747, %v976
        %v1014 = vadd.f32 %v749, %v978
        %v1015 = vadd.f32 %v751, %v980
        %v1016 = vadd.f32 %v755, %v984
        %v1017 = vadd.f32 %v757, %v986
        %v1018 = vadd.f32 %v759, %v988
        %v1019 = vadd.f32 %v761, %v990
        %v1020 = vadd.f32 %v765, %v994
        %v1021 = vadd.f32 %v767, %v996
        %v1022 = vadd.f32 %v769, %v998
        %v1023 = vadd.f32 %v771, %v1000
        %v1024 = vadd.f32 %v775, %v1004
        %v1025 = vadd.f32 %v777, %v1006
        %v1026 = vadd.f32 %v779, %v1008
        %v1027 = vadd.f32 %v781, %v1010
        %v1028 = vxor.u32 %v1013, 2147483648
        %v1029 = vxor.u32 %v1015, 2147483648
        %v1030 = vxor.u32 %v1017, 2147483648
        %v1031 = vxor.u32 %v1019, 2147483648
        %v1032 = vxor.u32 %v1021, 2147483648
        %v1033 = vxor.u32 %v1023, 2147483648
        %v1034 = vxor.u32 %v1025, 2147483648
        %v1035 = vxor.u32 %v1027, 2147483648
        %v1036 = vmul.f32 %v1028, 1.442695
        %v1037 = vpow.pop %v1036
        %v1038 = vmul.f32 %v1029, 1.442695
        %v1039 = vpow.pop %v1038
        %v1040 = vmul.f32 %v1030, 1.442695
        %v1041 = vpow.pop %v1040
        %v1042 = vmul.f32 %v1031, 1.442695
        %v1043 = vpow.pop %v1042
        %v1044 = vmul.f32 %v1032, 1.442695
        %v1045 = vpow.pop %v1044
        %v1046 = vmul.f32 %v1033, 1.442695
        %v1047 = vpow.pop %v1046
        %v1048 = vmul.f32 %v1034, 1.442695
        %v1049 = vpow.pop %v1048
        %v1050 = vmul.f32 %v1035, 1.442695
        %v1051 = vpow.pop %v1050
        %v1052 = vadd.f32 %v1037, 1.0
        %v1053 = vadd.f32 %v1039, 1.0
        %v1054 = vadd.f32 %v1041, 1.0
        %v1055 = vadd.f32 %v1043, 1.0
        %v1056 = vadd.f32 %v1045, 1.0
        %v1057 = vadd.f32 %v1047, 1.0
        %v1058 = vadd.f32 %v1049, 1.0
        %v1059 = vadd.f32 %v1051, 1.0
        %v1060 = vrcp.pop %v1052
        %v1061 = vmul.f32 1.0, %v1060
        %v1062 = vrcp.pop %v1053
        %v1063 = vmul.f32 1.0, %v1062
        %v1064 = vrcp.pop %v1054
        %v1065 = vmul.f32 1.0, %v1064
        %v1066 = vrcp.pop %v1055
        %v1067 = vmul.f32 1.0, %v1066
        %v1068 = vrcp.pop %v1056
        %v1069 = vmul.f32 1.0, %v1068
        %v1070 = vrcp.pop %v1057
        %v1071 = vmul.f32 1.0, %v1070
        %v1072 = vrcp.pop %v1058
        %v1073 = vmul.f32 1.0, %v1072
        %v1074 = vrcp.pop %v1059
        %v1075 = vmul.f32 1.0, %v1074
        %v1076 = vmul.f32 %v1012, %v1061
        %v1077 = vmul.f32 %v1014, %v1063
        %v1078 = vmul.f32 %v1016, %v1065
        %v1079 = vmul.f32 %v1018, %v1067
        %v1080 = vmul.f32 %v1020, %v1069
        %v1081 = vmul.f32 %v1022, %v1071
        %v1082 = vmul.f32 %v1024, %v1073
        %v1083 = vmul.f32 %v1026, %v1075
        %1084 = vst [vmem:[%s351] sm:$0xff] %v1076
        %1085 = vst [vmem:[%s351 + $0x8] sm:$0xff] %v1077
        %1086 = vst [vmem:[%s351 + $0x10] sm:$0xff] %v1078
        %1087 = vst [vmem:[%s351 + $0x18] sm:$0xff] %v1079
        %1088 = vst [vmem:[%s351 + $0x20] sm:$0xff] %v1080
        %1089 = vst [vmem:[%s351 + $0x28] sm:$0xff] %v1081
        %1090 = vst [vmem:[%s351 + $0x30] sm:$0xff] %v1082
        %1091 = vst [vmem:[%s351 + $0x38] sm:$0xff] %v1083
        %s1092 = sand.u32 %s168, 1
        %s1093 = scalar_lea.sflag [#allocation4], %s1092
        %s1094 = sand.u32 %s168, 1
        %s1095 = smul.addr %s1094, 64
        %s1096 = scalar_lea.vmem [#allocation10], %s1095
        // Predicated region
        $region53: #{tpu_custom_call.1} parent=35 // pred_check
          %p1097 = pneg %p178
        $region54: #{tpu_custom_call.1} parent=35 // pred_check_branch
          %1099 = sbr.rel (%p1097) target = $region56
        $region55: #{tpu_custom_call.1} parent=35 // pred_region
          %s1100 = smul.u32 8, %s30
          %s1102 = ssub.s32 1024, 1024
          %1103 = vsyncadd %s1093, %s1102
          %s1104 = smul.addr %s29, 32
          %s1105 = sadd.s32 %s1100, %s1104
          %s1106 = smul.addr %s1105, 128
          %s1107 = scalar_lea.hbm %s4, %s1106
          %s1108 = sshll.u32 %s1096, 4
          %s1109 = int_to_ptr.vmem [resolvable:$true] %s1108
          %1114 = dma.vmem_to_hbm [thread:$0]  %s1109, 1024, %s1107, %s1093, 128, 128, 8
        $region56: #{tpu_custom_call.1} parent=35 // pred_fallthru
          _
      $region36: #{tpu_custom_call.1} parent=5 // pred_fallthru
        _
      %p1115 = scmp.le.s32.totalorder 2, %s20
      // Predicated region
      $region57: #{tpu_custom_call.1} parent=5 // pred_check
        %p1116 = pneg %p1115
      $region58: #{tpu_custom_call.1} parent=5 // pred_check_branch
        %1118 = sbr.rel (%p1116) target = $region60
      $region59: #{tpu_custom_call.1} parent=5 // pred_region
        %s1119 = ssub.s32 %s20, 2
        // Predicated region
        $region61: #{tpu_custom_call.1} parent=59 // pred_check
          %p1120 = pneg %p184
        $region62: #{tpu_custom_call.1} parent=59 // pred_check_branch
          %1122 = sbr.rel (%p1120) target = $region64
        $region63: #{tpu_custom_call.1} parent=59 // pred_region
          %s1123 = sand.u32 %s169, 1
          %s1124 = scalar_lea.sflag [#allocation4], %s1123
          %s1125 = sand.u32 %s169, 1
          %s1126 = smul.addr %s1125, 64
          %s1127 = scalar_lea.vmem [#allocation10], %s1126
          %1128 = dma.done %s1124, 1024
        $region64: #{tpu_custom_call.1} parent=59 // pred_fallthru
          _
      $region60: #{tpu_custom_call.1} parent=5 // pred_fallthru
        _
    $region6: #{tpu_custom_call.1} parent=1 // loop_footer
      %s24 = sadd.s32 1, %s20
    $region7: #{tpu_custom_call.1} parent=1 // loop_footer_branch
      %19 = sbr.rel target = $region3
    $region8: #{tpu_custom_call.1} parent=1 // loop_exit
      _
    %1129 = vsyncpa [#allocation3], 1
    %s1130 = scalar_lea.sflag [#allocation3], 1
    %1131 = vsyncpa %s1130, 1
    %1132 = vsyncpa [#allocation6], 1
    %s1133 = scalar_lea.sflag [#allocation6], 1
    %1134 = vsyncpa %s1133, 1
    %1135 = vsyncpa [#allocation9], 1
    %1136 = vsyncpa [#allocation4], 1
    %s1137 = scalar_lea.sflag [#allocation4], 1
    %1138 = vsyncpa %s1137, 1

</llo_original>
